<compile_context>
chip_gen: v7x
topology: tpu7x:2x2x1
jax: 0.10.0
libtpu: 0.0.40
codegen_flags: <defaults>
</compile_context>

<pallas_src>
import functools
import math

import jax
import jax.numpy as jnp
import numpy as np
from jax.experimental import pallas as pl
from jax.experimental.pallas import tpu as pltpu


def _round_up(x, m):
    return (x + m - 1) // m * m


def _pick_tile(dim, desired, align=128):
    """Largest multiple of `align` that divides `dim` and is <= desired."""
    assert dim % align == 0
    t = max(align, (min(desired, dim) // align) * align)
    while dim % t != 0:
        t -= align
    return t


def _vmem_budget_bytes():
    """~75% of physical per-core VMEM (leave headroom for compiler scratch)."""
    cap = None
    try:
        info = pltpu.get_tpu_info()
        cap = getattr(info, "vmem_capacity_bytes", None)
    except Exception:
        cap = None
    if not cap:
        try:
            kind = jax.devices()[0].device_kind.lower()
        except Exception:
            kind = ""
        if "v7" in kind:
            cap = 64 << 20            # v7x: 64 MiB per TensorCore
        elif any(v in kind for v in ("v4", "v5", "v6")):
            cap = 128 << 20           # v4/v5e/v6e: 128 MiB
        else:
            cap = 64 << 20            # unknown: be conservative
    return (cap * 3) // 4


# -----------------------------------------------------------------------------
# Tiled linear kernel:  y = act(x @ w + b)
# -----------------------------------------------------------------------------
def _linear_kernel(x_ref, w_ref, b_ref, o_ref, acc_ref, *, activation):
    """Produces one (tm, tn) output tile; reduction runs over grid axis 2."""
    k = pl.program_id(2)

    @pl.when(k == 0)
    def _():
        acc_ref[...] = jnp.zeros_like(acc_ref)

    # bf16 operands hit the MXU natively; accumulate in f32.
    acc_ref[...] += jnp.dot(x_ref[...], w_ref[...],
                            preferred_element_type=jnp.float32)

    @pl.when(k == pl.num_programs(2) - 1)
    def _():
        acc = acc_ref[...] + b_ref[...].astype(jnp.float32)   # (1, tn) broadcast
        if activation == "silu":
            # x * sigmoid(x): exp and the approximate reciprocal both use the
            # EUP slot, keeping the epilogue off the VALU.
            acc = acc * pl.reciprocal(1.0 + jnp.exp(-acc), approx=True)
        o_ref[...] = acc.astype(o_ref.dtype)


def linear_pallas(x, w, b2d, activation=None, *, out_dtype=None,
                  tm=256, tn=512, tk=512):
    """Tiled, pipelined linear layer with fused bias + optional SiLU epilogue.

    Expects `w` (K, N) and `b2d` (1, N) already padded to 128-multiples and in
    the desired compute dtype (see prepare_params); only pads x's M here.
    """
    M, K = x.shape
    Kw, N = w.shape
    assert K == Kw and b2d.shape == (1, N)
    assert K % 128 == 0 and N % 128 == 0, "pad weights via prepare_params first"
    out_dtype = out_dtype or x.dtype

    # Tile selection: (8, 128)-aligned, divisors of the padded K/N dims.
    tm = min(tm, _round_up(M, 8))
    tk = _pick_tile(K, tk)
    tn = _pick_tile(N, tn)
    Mp = _round_up(M, tm)
    # Keep >= 2 blocks on a parallel axis when possible so v7x's two
    # TensorCores both get work (M often collapses to one block).
    if (Mp // tm) * (N // tn) < 2 and tn % 256 == 0:
        tn //= 2

    if Mp != M:
        x = jnp.pad(x, ((0, Mp - M), (0, 0)))

    grid = (Mp // tm, N // tn, K // tk)

    xi = jnp.dtype(x.dtype).itemsize
    wi = jnp.dtype(w.dtype).itemsize
    bi = jnp.dtype(b2d.dtype).itemsize
    oi = jnp.dtype(out_dtype).itemsize

    # Deeper prefetch on the weight operand (its block index changes every k
    # step) when the K loop is long enough to benefit.
    n_wbuf = 3 if (K // tk) >= 3 else 2
    if n_wbuf == 3:
        w_spec = pl.BlockSpec((tk, tn), lambda i, j, k: (k, j),
                              pipeline_mode=pl.Buffered(3))
    else:
        w_spec = pl.BlockSpec((tk, tn), lambda i, j, k: (k, j))

    # Exact VMEM footprint (no double counting): buffered in/out tiles,
    # sublane-padded bias tiles, f32 accumulator; then a 1.5x safety margin,
    # capped at the per-generation budget.
    tile_bytes = (2 * tm * tk * xi          # double-buffered LHS tiles
                  + n_wbuf * tk * tn * wi   # buffered weight tiles
                  + 2 * 8 * tn * bi         # bias tiles (sublane-padded to 8)
                  + 2 * tm * tn * oi        # double-buffered output tiles
                  + tm * tn * 4)            # f32 accumulator scratch
    vmem_limit = int(min(_vmem_budget_bytes(),
                         max(int(1.5 * tile_bytes), 32 << 20)))

    cost = pl.CostEstimate(
        flops=2 * Mp * N * K,
        transcendentals=(Mp * N) if activation == "silu" else 0,
        bytes_accessed=(Mp * K * xi + K * N * wi + N * bi + Mp * N * oi),
    )

    out = pl.pallas_call(
        functools.partial(_linear_kernel, activation=activation),
        out_shape=jax.ShapeDtypeStruct((Mp, N), out_dtype),
        grid_spec=pltpu.PrefetchScalarGridSpec(
            num_scalar_prefetch=0,
            grid=grid,
            in_specs=[
                pl.BlockSpec((tm, tk), lambda i, j, k: (i, k)),
                w_spec,
                pl.BlockSpec((1, tn), lambda i, j, k: (0, j)),
            ],
            out_specs=pl.BlockSpec((tm, tn), lambda i, j, k: (i, j)),
            scratch_shapes=[pltpu.VMEM((tm, tn), jnp.float32)],
        ),
        compiler_params=pltpu.CompilerParams(
            dimension_semantics=("parallel", "parallel", "arbitrary"),
            vmem_limit_bytes=vmem_limit,
        ),
        cost_estimate=cost,
    )(x, w, b2d)

    return out[:M] if Mp != M else out


# -----------------------------------------------------------------------------
# VectorEmbedder: Linear(input_dim -> hidden) -> SiLU -> Linear(hidden -> hidden)
# -----------------------------------------------------------------------------
def init_params(key, input_dim, hidden, dtype=jnp.float32):
    """Same init scheme as torch.nn.Linear (uniform +/- 1/sqrt(fan_in))."""
    k1, k2, k3, k4 = jax.random.split(key, 4)

    def u(k, shape, fan_in):
        bound = 1.0 / math.sqrt(fan_in)
        return jax.random.uniform(k, shape, dtype, -bound, bound)

    return {
        "w1": u(k1, (input_dim, hidden), input_dim),
        "b1": u(k2, (hidden,), input_dim),
        "w2": u(k3, (hidden, hidden), hidden),
        "b2": u(k4, (hidden,), hidden),
    }


def prepare_params(params, compute_dtype=jnp.bfloat16, align=128):
    """One-time: pad weights/biases to 128-multiples and cast weights to the
    compute dtype, so no weight copies happen in the per-call hot path."""
    w1, b1, w2, b2 = params["w1"], params["b1"], params["w2"], params["b2"]
    K, H = w1.shape
    Kp, Hp = _round_up(K, align), _round_up(H, align)
    return {
        "w1": jnp.pad(w1, ((0, Kp - K), (0, Hp - H))).astype(compute_dtype),
        "b1": jnp.pad(b1, (0, Hp - H)).astype(jnp.float32).reshape(1, Hp),
        "w2": jnp.pad(w2, ((0, Hp - H), (0, Hp - H))).astype(compute_dtype),
        "b2": jnp.pad(b2, (0, Hp - H)).astype(jnp.float32).reshape(1, Hp),
    }


def vector_embedder_forward(x, params, *, hidden):
    w1 = params["w1"]
    Kp = w1.shape[0]
    lead = x.shape[:-1]
    # Flatten leading dims into M; cast activations to the compute dtype and
    # pad K once (tiny vs the weight traffic).
    x2 = x.reshape(-1, x.shape[-1]).astype(w1.dtype)
    if x2.shape[1] != Kp:
        x2 = jnp.pad(x2, ((0, 0), (0, Kp - x2.shape[1])))
    # SiLU fused into layer 1's epilogue; h stays bf16 so layer 2 reads half
    # the bytes.  Padded hidden columns of h are exactly zero (zero pad weights
    # + zero pad bias -> SiLU(0)=0), so they are matmul-neutral for layer 2.
    h = linear_pallas(x2, w1, params["b1"], activation="silu",
                      out_dtype=w1.dtype)
    out = linear_pallas(h, params["w2"], params["b2"], activation=None,
                        out_dtype=jnp.float32)
    out = out[:, :hidden]
    return out.reshape(*lead, hidden)


# -----------------------------------------------------------------------------
# Pure-JAX reference (same bf16 operand / f32 accumulate semantics)
# -----------------------------------------------------------------------------
def _reference(x, p, compute_dtype=jnp.bfloat16):
    h = jnp.dot(x.astype(compute_dtype), p["w1"].astype(compute_dtype),
                preferred_element_type=jnp.float32) + p["b1"].astype(jnp.float32)
    h = h * jax.nn.sigmoid(h)
    out = jnp.dot(h.astype(compute_dtype), p["w2"].astype(compute_dtype),
                  preferred_element_type=jnp.float32) + p["b2"].astype(jnp.float32)
    return out


# -----------------------------------------------------------------------------
if __name__ == "__main__":
    B, IN_DIM, HIDDEN = 2, 32, 32

    key = jax.random.PRNGKey(0)
    kx, kp = jax.random.split(key)
    x = jax.random.normal(kx, (B, IN_DIM), jnp.float32)
    raw_params = init_params(kp, IN_DIM, HIDDEN)
    params = prepare_params(raw_params)   # pad + bf16 cast, once, outside jit

    fwd = jax.jit(functools.partial(vector_embedder_forward, hidden=HIDDEN))
    out = jax.block_until_ready(fwd(x, params))
    ref = jax.block_until_ready(_reference(x, raw_params))

    assert out.shape == (B, HIDDEN)
    np.testing.assert_allclose(np.asarray(out), np.asarray(ref),
                               rtol=2e-2, atol=2e-2)
    print("KERNEL_OK")
</pallas_src>

<mosaic_0001>
module attributes {stable_mosaic.version = 11 : i64} {
  func.func @_linear_kernel(%arg0: i32, %arg1: i32, %arg2: i32, %arg3: memref<8x128xbf16, #tpu.memory_space<vmem>>, %arg4: memref<128x128xbf16, #tpu.memory_space<vmem>>, %arg5: memref<1x128xf32, #tpu.memory_space<vmem>>, %arg6: memref<8x128xbf16, #tpu.memory_space<vmem>>, %arg7: memref<8x128xf32, #tpu.memory_space<vmem>>) attributes {dimension_semantics = [#tpu.dimension_semantics<parallel>, #tpu.dimension_semantics<parallel>, #tpu.dimension_semantics<arbitrary>], iteration_bounds = array<i64: 1, 1, 1>, scalar_prefetch = 0 : i64, scratch_operands = 1 : i64, tpu.core_type = #tpu.core_type<tc>, window_params = [{transform_indices = @transform_0, window_bounds = array<i64: 8, 128>}, {transform_indices = @transform_1, window_bounds = array<i64: 128, 128>}, {transform_indices = @transform_2, window_bounds = array<i64: 1, 128>}, {transform_indices = @transform_3, window_bounds = array<i64: 8, 128>}]} {
    %c0_i32 = arith.constant 0 : i32
    %0 = arith.cmpi eq, %arg2, %c0_i32 : i32
    %1 = arith.extui %0 : i1 to i32
    %c0_i32_0 = arith.constant 0 : i32
    %2 = arith.cmpi ne, %1, %c0_i32_0 : i32
    scf.if %2 {
      %cst_10 = arith.constant 0.000000e+00 : f32
      %12 = vector.broadcast %cst_10 : f32 to vector<8x128xf32>
      %c0_11 = arith.constant 0 : index
      %c0_12 = arith.constant 0 : index
      %13 = vector.load %arg7[%c0_11, %c0_12] : memref<8x128xf32, #tpu.memory_space<vmem>>, vector<8x128xf32>
      tpu.vector_store %arg7[%c0_11, %c0_12], %12 {strides = array<i32>} : memref<8x128xf32, #tpu.memory_space<vmem>>, vector<8x128xf32>,
    } else {
    }
    %c0 = arith.constant 0 : index
    %c0_1 = arith.constant 0 : index
    %3 = vector.load %arg7[%c0, %c0_1] : memref<8x128xf32, #tpu.memory_space<vmem>>, vector<8x128xf32>
    %c0_2 = arith.constant 0 : index
    %c0_3 = arith.constant 0 : index
    %4 = vector.load %arg3[%c0_2, %c0_3] : memref<8x128xbf16, #tpu.memory_space<vmem>>, vector<8x128xbf16>
    %c0_4 = arith.constant 0 : index
    %c0_5 = arith.constant 0 : index
    %5 = vector.load %arg4[%c0_4, %c0_5] : memref<128x128xbf16, #tpu.memory_space<vmem>>, vector<128x128xbf16>
    %cst = arith.constant dense<0.000000e+00> : vector<8x128xf32>
    %6 = tpu.matmul %4, %5, %cst {dimension_numbers = #tpu.dot_dimension_numbers<[1], [0], [0], [1], [0, 0, 1, 1], [], []>} : vector<8x128xbf16>, vector<128x128xbf16>, vector<8x128xf32> -> vector<8x128xf32>
    %7 = arith.addf %3, %6 : vector<8x128xf32>
    %c0_6 = arith.constant 0 : index
    %c0_7 = arith.constant 0 : index
    %8 = vector.load %arg7[%c0_6, %c0_7] : memref<8x128xf32, #tpu.memory_space<vmem>>, vector<8x128xf32>
    tpu.vector_store %arg7[%c0_6, %c0_7], %7 {strides = array<i32>} : memref<8x128xf32, #tpu.memory_space<vmem>>, vector<8x128xf32>,
    %c0_i32_8 = arith.constant 0 : i32
    %9 = arith.cmpi eq, %arg2, %c0_i32_8 : i32
    %10 = arith.extui %9 : i1 to i32
    %c0_i32_9 = arith.constant 0 : i32
    %11 = arith.cmpi ne, %10, %c0_i32_9 : i32
    scf.if %11 {
      %c0_10 = arith.constant 0 : index
      %c0_11 = arith.constant 0 : index
      %12 = vector.load %arg7[%c0_10, %c0_11] : memref<8x128xf32, #tpu.memory_space<vmem>>, vector<8x128xf32>
      %c0_12 = arith.constant 0 : index
      %c0_13 = arith.constant 0 : index
      %13 = vector.load %arg5[%c0_12, %c0_13] : memref<1x128xf32, #tpu.memory_space<vmem>>, vector<1x128xf32>
      %14 = vector.broadcast %13 : vector<1x128xf32> to vector<8x128xf32>
      %15 = arith.addf %12, %14 : vector<8x128xf32>
      %cst_14 = arith.constant 0.000000e+00 : f32
      %16 = vector.broadcast %cst_14 : f32 to vector<8x128xf32>
      %17 = arith.subf %16, %15 : vector<8x128xf32>
      %18 = math.exp %17 : vector<8x128xf32>
      %cst_15 = arith.constant 1.000000e+00 : f32
      %19 = vector.broadcast %cst_15 : f32 to vector<8x128xf32>
      %20 = arith.addf %19, %18 : vector<8x128xf32>
      %21 = tpu.reciprocal %20 {approx = true} : vector<8x128xf32> -> vector<8x128xf32>
      %22 = arith.mulf %15, %21 : vector<8x128xf32>
      %23 = arith.truncf %22 : vector<8x128xf32> to vector<8x128xbf16>
      %c0_16 = arith.constant 0 : index
      %c0_17 = arith.constant 0 : index
      %24 = vector.load %arg6[%c0_16, %c0_17] : memref<8x128xbf16, #tpu.memory_space<vmem>>, vector<8x128xbf16>
      tpu.vector_store %arg6[%c0_16, %c0_17], %23 {strides = array<i32>} : memref<8x128xbf16, #tpu.memory_space<vmem>>, vector<8x128xbf16>,
    } else {
    }
    return
  }
  func.func @transform_0(%arg0: i32, %arg1: i32, %arg2: i32) -> (i32, i32) {
    %c0_i32 = arith.constant 0 : i32
    return %arg0, %arg2 : i32, i32
  }
  func.func @transform_1(%arg0: i32, %arg1: i32, %arg2: i32) -> (i32, i32) {
    %c0_i32 = arith.constant 0 : i32
    return %arg2, %arg1 : i32, i32
  }
  func.func @transform_2(%arg0: i32, %arg1: i32, %arg2: i32) -> (i32, i32) {
    %c0_i32 = arith.constant 0 : i32
    %c0_i32_0 = arith.constant 0 : i32
    return %c0_i32, %arg1 : i32, i32
  }
  func.func @transform_3(%arg0: i32, %arg1: i32, %arg2: i32) -> (i32, i32) {
    %c0_i32 = arith.constant 0 : i32
    return %arg0, %arg1 : i32, i32
  }
}

module attributes {stable_mosaic.version = 11 : i64} {
  func.func @_linear_kernel(%arg0: i32, %arg1: i32, %arg2: i32, %arg3: memref<8x128xbf16, #tpu.memory_space<vmem>>, %arg4: memref<128x128xbf16, #tpu.memory_space<vmem>>, %arg5: memref<1x128xf32, #tpu.memory_space<vmem>>, %arg6: memref<8x128xf32, #tpu.memory_space<vmem>>, %arg7: memref<8x128xf32, #tpu.memory_space<vmem>>) attributes {dimension_semantics = [#tpu.dimension_semantics<parallel>, #tpu.dimension_semantics<parallel>, #tpu.dimension_semantics<arbitrary>], iteration_bounds = array<i64: 1, 1, 1>, scalar_prefetch = 0 : i64, scratch_operands = 1 : i64, tpu.core_type = #tpu.core_type<tc>, window_params = [{transform_indices = @transform_0, window_bounds = array<i64: 8, 128>}, {transform_indices = @transform_1, window_bounds = array<i64: 128, 128>}, {transform_indices = @transform_2, window_bounds = array<i64: 1, 128>}, {transform_indices = @transform_3, window_bounds = array<i64: 8, 128>}]} {
    %c0_i32 = arith.constant 0 : i32
    %0 = arith.cmpi eq, %arg2, %c0_i32 : i32
    %1 = arith.extui %0 : i1 to i32
    %c0_i32_0 = arith.constant 0 : i32
    %2 = arith.cmpi ne, %1, %c0_i32_0 : i32
    scf.if %2 {
      %cst_10 = arith.constant 0.000000e+00 : f32
      %12 = vector.broadcast %cst_10 : f32 to vector<8x128xf32>
      %c0_11 = arith.constant 0 : index
      %c0_12 = arith.constant 0 : index
      %13 = vector.load %arg7[%c0_11, %c0_12] : memref<8x128xf32, #tpu.memory_space<vmem>>, vector<8x128xf32>
      tpu.vector_store %arg7[%c0_11, %c0_12], %12 {strides = array<i32>} : memref<8x128xf32, #tpu.memory_space<vmem>>, vector<8x128xf32>,
    } else {
    }
    %c0 = arith.constant 0 : index
    %c0_1 = arith.constant 0 : index
    %3 = vector.load %arg7[%c0, %c0_1] : memref<8x128xf32, #tpu.memory_space<vmem>>, vector<8x128xf32>
    %c0_2 = arith.constant 0 : index
    %c0_3 = arith.constant 0 : index
    %4 = vector.load %arg3[%c0_2, %c0_3] : memref<8x128xbf16, #tpu.memory_space<vmem>>, vector<8x128xbf16>
    %c0_4 = arith.constant 0 : index
    %c0_5 = arith.constant 0 : index
    %5 = vector.load %arg4[%c0_4, %c0_5] : memref<128x128xbf16, #tpu.memory_space<vmem>>, vector<128x128xbf16>
    %cst = arith.constant dense<0.000000e+00> : vector<8x128xf32>
    %6 = tpu.matmul %4, %5, %cst {dimension_numbers = #tpu.dot_dimension_numbers<[1], [0], [0], [1], [0, 0, 1, 1], [], []>} : vector<8x128xbf16>, vector<128x128xbf16>, vector<8x128xf32> -> vector<8x128xf32>
    %7 = arith.addf %3, %6 : vector<8x128xf32>
    %c0_6 = arith.constant 0 : index
    %c0_7 = arith.constant 0 : index
    %8 = vector.load %arg7[%c0_6, %c0_7] : memref<8x128xf32, #tpu.memory_space<vmem>>, vector<8x128xf32>
    tpu.vector_store %arg7[%c0_6, %c0_7], %7 {strides = array<i32>} : memref<8x128xf32, #tpu.memory_space<vmem>>, vector<8x128xf32>,
    %c0_i32_8 = arith.constant 0 : i32
    %9 = arith.cmpi eq, %arg2, %c0_i32_8 : i32
    %10 = arith.extui %9 : i1 to i32
    %c0_i32_9 = arith.constant 0 : i32
    %11 = arith.cmpi ne, %10, %c0_i32_9 : i32
    scf.if %11 {
      %c0_10 = arith.constant 0 : index
      %c0_11 = arith.constant 0 : index
      %12 = vector.load %arg7[%c0_10, %c0_11] : memref<8x128xf32, #tpu.memory_space<vmem>>, vector<8x128xf32>
      %c0_12 = arith.constant 0 : index
      %c0_13 = arith.constant 0 : index
      %13 = vector.load %arg5[%c0_12, %c0_13] : memref<1x128xf32, #tpu.memory_space<vmem>>, vector<1x128xf32>
      %14 = vector.broadcast %13 : vector<1x128xf32> to vector<8x128xf32>
      %15 = arith.addf %12, %14 : vector<8x128xf32>
      %c0_14 = arith.constant 0 : index
      %c0_15 = arith.constant 0 : index
      %16 = vector.load %arg6[%c0_14, %c0_15] : memref<8x128xf32, #tpu.memory_space<vmem>>, vector<8x128xf32>
      tpu.vector_store %arg6[%c0_14, %c0_15], %15 {strides = array<i32>} : memref<8x128xf32, #tpu.memory_space<vmem>>, vector<8x128xf32>,
    } else {
    }
    return
  }
  func.func @transform_0(%arg0: i32, %arg1: i32, %arg2: i32) -> (i32, i32) {
    %c0_i32 = arith.constant 0 : i32
    return %arg0, %arg2 : i32, i32
  }
  func.func @transform_1(%arg0: i32, %arg1: i32, %arg2: i32) -> (i32, i32) {
    %c0_i32 = arith.constant 0 : i32
    return %arg2, %arg1 : i32, i32
  }
  func.func @transform_2(%arg0: i32, %arg1: i32, %arg2: i32) -> (i32, i32) {
    %c0_i32 = arith.constant 0 : i32
    %c0_i32_0 = arith.constant 0 : i32
    return %c0_i32, %arg1 : i32, i32
  }
  func.func @transform_3(%arg0: i32, %arg1: i32, %arg2: i32) -> (i32, i32) {
    %c0_i32 = arith.constant 0 : i32
    return %arg0, %arg1 : i32, i32
  }
}

</mosaic_0001>

<llo_original>
// kernel: vector_embedder_forward.2
$region0: #{vector_embedder_forward.2}
  #allocation0 [shape = 'u32[]', space=smem, size = 0x4, offset = 0x4, fixed_abs, tag = 'smem constant byte address 0x4 - core index']
  #allocation1 [shape = 'u32[144,128]{1,0:T(1,128)}', space=vmem, size = 0x12000, scoped, tag = 'internal scratch']
  #allocation2 [shape = 'f32[8,128]{1,0:T(8,128)}', space=vmem, size = 0x1000, scoped, tag = 'scratch operand']
  %s0 = inlined_call_operand.vmem [shape: bf16[8,128], index: 0, kind: input, shape index: {}]
  %s1 = inlined_call_operand.hbm [shape: bf16[128,128], index: 1, kind: input, shape index: {}]
  %s2 = inlined_call_operand.hbm [shape: f32[1,128], index: 2, kind: input, shape index: {}]
  %s3 = inlined_call_operand.vmem [shape: bf16[8,128], index: 3, kind: output, shape index: {}]
  %s4 = sld [smem:[#allocation0]]
  $region38: #{vector_embedder_forward.2} parent=0
    _
  %s6 = ssub.s32 1, %s4
  %s7 = scalar_select 0, %s6, %s4
  $region1: #{vector_embedder_forward.2} parent=0
    #allocation3 [shape = 'u8[32768]{0}', space=vmem, size = 0x8000, scoped, tag = 'input window, operand 1, single buffered']
    #allocation4 [shape = 's32[1]{0}', space=sflag, size = 0x4, scoped, tag = 'scoped memory for vector_embedder_forward.2']
    #allocation5 [shape = 'u8[512]{0}', space=vmem, size = 0x400, scoped, tag = 'input window, operand 2, single buffered']
    #allocation6 [shape = 's32[1]{0}', space=sflag, size = 0x4, scoped, tag = 'scoped memory for vector_embedder_forward.2']
    %8 = vsyncpa [#allocation4], 0
    %9 = vsyncpa [#allocation6], 0
    // Predicated region
    $region2: #{vector_embedder_forward.2} parent=1 // pred_check
      _
    $region3: #{vector_embedder_forward.2} parent=1 // pred_check_branch
      %11 = sbr.rel (0) target = $region5
    $region4: #{vector_embedder_forward.2} parent=1 // pred_region
      _
    $region5: #{vector_embedder_forward.2} parent=1 // pred_fallthru
      _
    // Predicated region
    $region6: #{vector_embedder_forward.2} parent=1 // pred_check
      _
    $region7: #{vector_embedder_forward.2} parent=1 // pred_check_branch
      %13 = sbr.rel (0) target = $region9
    $region8: #{vector_embedder_forward.2} parent=1 // pred_region
      %s15 = ssub.s32 1024, 1024
      %16 = vsyncadd [#allocation4], %s15
      %s17 = sshll.u32 [#allocation3], 4
      %s18 = int_to_ptr.vmem [resolvable:$true] %s17
      %23 = dma.hbm_to_vmem [thread:$0]  %s1, 1024, %s18, [#allocation4], 64, 64, 4
    $region9: #{vector_embedder_forward.2} parent=1 // pred_fallthru
      _
    // Predicated region
    $region10: #{vector_embedder_forward.2} parent=1 // pred_check
      _
    $region11: #{vector_embedder_forward.2} parent=1 // pred_check_branch
      %25 = sbr.rel (0) target = $region13
    $region12: #{vector_embedder_forward.2} parent=1 // pred_region
      %s27 = ssub.s32 16, 16
      %28 = vsyncadd [#allocation6], %s27
      %s30 = sshll.u32 [#allocation5], 4
      %s31 = int_to_ptr.vmem [resolvable:$true] %s30
      %33 = dma.hbm_to_vmem [thread:$0]  %s2, 16, %s31, [#allocation6]
    $region13: #{vector_embedder_forward.2} parent=1 // pred_fallthru
      _
    // Predicated region
    $region14: #{vector_embedder_forward.2} parent=1 // pred_check
      _
    $region15: #{vector_embedder_forward.2} parent=1 // pred_check_branch
      %35 = sbr.rel (0) target = $region17
    $region16: #{vector_embedder_forward.2} parent=1 // pred_region
      %36 = dma.done [#allocation4], 1024
    $region17: #{vector_embedder_forward.2} parent=1 // pred_fallthru
      _
    // Predicated region
    $region18: #{vector_embedder_forward.2} parent=1 // pred_check
      _
    $region19: #{vector_embedder_forward.2} parent=1 // pred_check_branch
      %38 = sbr.rel (0) target = $region21
    $region20: #{vector_embedder_forward.2} parent=1 // pred_region
      %39 = dma.done [#allocation6], 16
    $region21: #{vector_embedder_forward.2} parent=1 // pred_fallthru
      _
    %p41 = scmp.eq.s32.totalorder 0, 0
    // Predicated region
    $region22: #{vector_embedder_forward.2} parent=1 // pred_check
      %p42 = pneg %p41
    $region23: #{vector_embedder_forward.2} parent=1 // pred_check_branch
      %44 = sbr.rel (%p42) target = $region25
    $region24: #{vector_embedder_forward.2} parent=1 // pred_region
      %45 = vst [vmem:[#allocation2] sm:$0xff] 0.0
    $region25: #{vector_embedder_forward.2} parent=1 // pred_fallthru
      _
    %v46 = vld [vmem:[#allocation2] sm:$0xff]
    %v47 = vld [vmem:[%s0] sm:$0xf]
    %v48 = vld [vmem:[#allocation3] sm:$0xf]
    %v49 = vld [vmem:[#allocation3 + $0x4] sm:$0xf]
    %v50 = vld [vmem:[#allocation3 + $0x8] sm:$0xf]
    %v51 = vld [vmem:[#allocation3 + $0xc] sm:$0xf]
    %v52 = vld [vmem:[#allocation3 + $0x10] sm:$0xf]
    %v53 = vld [vmem:[#allocation3 + $0x14] sm:$0xf]
    %v54 = vld [vmem:[#allocation3 + $0x18] sm:$0xf]
    %v55 = vld [vmem:[#allocation3 + $0x1c] sm:$0xf]
    %v56 = vld [vmem:[#allocation3 + $0x20] sm:$0xf]
    %v57 = vld [vmem:[#allocation3 + $0x24] sm:$0xf]
    %v58 = vld [vmem:[#allocation3 + $0x28] sm:$0xf]
    %v59 = vld [vmem:[#allocation3 + $0x2c] sm:$0xf]
    %v60 = vld [vmem:[#allocation3 + $0x30] sm:$0xf]
    %v61 = vld [vmem:[#allocation3 + $0x34] sm:$0xf]
    %v62 = vld [vmem:[#allocation3 + $0x38] sm:$0xf]
    %v63 = vld [vmem:[#allocation3 + $0x3c] sm:$0xf]
    %v80 = vunpack.c.l.b16 %v48
    %v81 = vunpack.c.l.b16 %v49
    %v82 = vunpack.c.l.b16 %v50
    %v83 = vunpack.c.l.b16 %v51
    %v84 = vunpack.c.l.b16 %v52
    %v85 = vunpack.c.l.b16 %v53
    %v86 = vunpack.c.l.b16 %v54
    %v87 = vunpack.c.l.b16 %v55
    %v88 = vunpack.c.l.b16 %v56
    %v89 = vunpack.c.l.b16 %v57
    %v90 = vunpack.c.l.b16 %v58
    %v91 = vunpack.c.l.b16 %v59
    %v92 = vunpack.c.l.b16 %v60
    %v93 = vunpack.c.l.b16 %v61
    %v94 = vunpack.c.l.b16 %v62
    %v95 = vunpack.c.l.b16 %v63
    %v96 = vpack.c.b16 %v81, %v80
    %v97 = vpack.c.b16 %v83, %v82
    %v98 = vpack.c.b16 %v85, %v84
    %v99 = vpack.c.b16 %v87, %v86
    %v100 = vpack.c.b16 %v89, %v88
    %v101 = vpack.c.b16 %v91, %v90
    %v102 = vpack.c.b16 %v93, %v92
    %v103 = vpack.c.b16 %v95, %v94
    %112 = vmatprep.subr.bf16.mxu0 0
    %113 = vmatpush1.bf16.msra.mxu0 %v96
    %114 = vmatprep.subr.bf16.mxu0 0
    %115 = vmatpush1.bf16.msra.mxu0 %v97
    %116 = vmatprep.subr.bf16.mxu0 0
    %117 = vmatpush1.bf16.msra.mxu0 %v98
    %118 = vmatprep.subr.bf16.mxu0 0
    %119 = vmatpush1.bf16.msra.mxu0 %v99
    %120 = vmatprep.subr.bf16.mxu0 0
    %121 = vmatpush1.bf16.msra.mxu0 %v100
    %122 = vmatprep.subr.bf16.mxu0 0
    %123 = vmatpush1.bf16.msra.mxu0 %v101
    %124 = vmatprep.subr.bf16.mxu0 0
    %125 = vmatpush1.bf16.msra.mxu0 %v102
    %126 = vmatprep.subr.bf16.mxu0 0
    %127 = vmatpush1.bf16.msra.mxu0 %v103
    %128 = vmatprep.subr.bf16.mxu0 0
    %129 = vmatpush1.bf16.msra.mxu0 0
    %130 = vmatprep.subr.bf16.mxu0 0
    %131 = vmatpush1.bf16.msra.mxu0 0
    %132 = vmatprep.subr.bf16.mxu0 0
    %133 = vmatpush1.bf16.msra.mxu0 0
    %134 = vmatprep.subr.bf16.mxu0 0
    %135 = vmatpush1.bf16.msra.mxu0 0
    %136 = vmatprep.subr.bf16.mxu0 0
    %137 = vmatpush1.bf16.msra.mxu0 0
    %138 = vmatprep.subr.bf16.mxu0 0
    %139 = vmatpush1.bf16.msra.mxu0 0
    %140 = vmatprep.subr.bf16.mxu0 0
    %141 = vmatpush1.bf16.msra.mxu0 0
    %142 = vmatprep.subr.bf16.mxu0 0
    %143 = vmatpush1.bf16.msra.mxu0 0
    %144 = vmatprep.mubr.bf16.mxu0 0
    %145 = vmatmul.mubr.bf16.gmra.mrb[0].mxu0 %v47
    %v146 = vpop.f32.mrb[0].mxu0
    %v147 = vadd.f32 0.0, %v146
    %v148 = vpop.f32.mrb[0].mxu0
    %v149 = vpop.f32.mrb[0].mxu0
    %v150 = vpop.f32.mrb[0].mxu0
    %151 = vdwg.mxu0
    %v152 = vadd.f32 %v46, %v147
    %153 = vst [vmem:[#allocation2] sm:$0xff] %v152
    // Predicated region
    $region26: #{vector_embedder_forward.2} parent=1 // pred_check
      %p154 = pneg %p41
    $region27: #{vector_embedder_forward.2} parent=1 // pred_check_branch
      %156 = sbr.rel (%p154) target = $region29
    $region28: #{vector_embedder_forward.2} parent=1 // pred_region
      %v157 = vld [vmem:[#allocation2] sm:$0xff]
      %v158 = vld [vmem:[#allocation5] sm:$0x1]
      %v160 = vlaneseq
      %v161 = vshrl.u32 %v160, 7
      %v162 = vsub.s32 0, %v161
      %v163 = vrot.slane %v158, %v162
      %v165 = vadd.f32 %v157, %v163
      %v166 = vsub.f32 0.0, %v165
      %v167 = vmul.f32 %v166, 1.442695
      %v168 = vpow.pop %v167
      %v169 = vadd.f32 %v168, 1.0
      %v170 = vrcp.pop %v169
      %v171 = vmul.f32 %v165, %v170
      %v172 = vpack.c.bf16 %v171, %v171
      %173 = vst [vmem:[%s3] sm:$0xf] %v172
    $region29: #{vector_embedder_forward.2} parent=1 // pred_fallthru
      _
    // Predicated region
    $region30: #{vector_embedder_forward.2} parent=1 // pred_check
      _
    $region31: #{vector_embedder_forward.2} parent=1 // pred_check_branch
      %175 = sbr.rel (0) target = $region33
    $region32: #{vector_embedder_forward.2} parent=1 // pred_region
      _
    $region33: #{vector_embedder_forward.2} parent=1 // pred_fallthru
      _
    // Predicated region
    $region34: #{vector_embedder_forward.2} parent=1 // pred_check
      _
    $region35: #{vector_embedder_forward.2} parent=1 // pred_check_branch
      %177 = sbr.rel (0) target = $region37
    $region36: #{vector_embedder_forward.2} parent=1 // pred_region
      _
    $region37: #{vector_embedder_forward.2} parent=1 // pred_fallthru
      _
    %178 = vsyncpa [#allocation4], 1
    %179 = vsyncpa [#allocation6], 1

// kernel: vector_embedder_forward.3
$region0: #{vector_embedder_forward.3}
  #allocation0 [shape = 'u32[]', space=smem, size = 0x4, offset = 0x4, fixed_abs, tag = 'smem constant byte address 0x4 - core index']
  #allocation1 [shape = 'u32[144,128]{1,0:T(1,128)}', space=vmem, size = 0x12000, scoped, tag = 'internal scratch']
  #allocation2 [shape = 'f32[8,128]{1,0:T(8,128)}', space=vmem, size = 0x1000, scoped, tag = 'scratch operand']
  %s0 = inlined_call_operand.vmem [shape: bf16[8,128], index: 0, kind: input, shape index: {}]
  %s1 = inlined_call_operand.vmem [shape: bf16[128,128], index: 1, kind: input, shape index: {}]
  %s2 = inlined_call_operand.vmem [shape: f32[1,128], index: 2, kind: input, shape index: {}]
  %s3 = inlined_call_operand.vmem [shape: f32[8,128], index: 3, kind: output, shape index: {}]
  %s4 = sld [smem:[#allocation0]]
  $region30: #{vector_embedder_forward.3} parent=0
    _
  %s6 = ssub.s32 1, %s4
  %s7 = scalar_select 0, %s6, %s4
  // Predicated region
  $region2: #{vector_embedder_forward.3} parent=0 // pred_check
    _
  $region3: #{vector_embedder_forward.3} parent=0 // pred_check_branch
    %9 = sbr.rel (0) target = $region5
  $region4: #{vector_embedder_forward.3} parent=0 // pred_region
    _
  $region5: #{vector_embedder_forward.3} parent=0 // pred_fallthru
    _
  // Predicated region
  $region6: #{vector_embedder_forward.3} parent=0 // pred_check
    _
  $region7: #{vector_embedder_forward.3} parent=0 // pred_check_branch
    %11 = sbr.rel (0) target = $region9
  $region8: #{vector_embedder_forward.3} parent=0 // pred_region
    _
  $region9: #{vector_embedder_forward.3} parent=0 // pred_fallthru
    _
  // Predicated region
  $region10: #{vector_embedder_forward.3} parent=0 // pred_check
    _
  $region11: #{vector_embedder_forward.3} parent=0 // pred_check_branch
    %13 = sbr.rel (0) target = $region13
  $region12: #{vector_embedder_forward.3} parent=0 // pred_region
    _
  $region13: #{vector_embedder_forward.3} parent=0 // pred_fallthru
    _
  %p15 = scmp.eq.s32.totalorder 0, 0
  // Predicated region
  $region14: #{vector_embedder_forward.3} parent=0 // pred_check
    %p16 = pneg %p15
  $region15: #{vector_embedder_forward.3} parent=0 // pred_check_branch
    %18 = sbr.rel (%p16) target = $region17
  $region16: #{vector_embedder_forward.3} parent=0 // pred_region
    %19 = vst [vmem:[#allocation2] sm:$0xff] 0.0
  $region17: #{vector_embedder_forward.3} parent=0 // pred_fallthru
    _
  %v20 = vld [vmem:[#allocation2] sm:$0xff]
  %v21 = vld [vmem:[%s0] sm:$0xf]
  %v22 = vld [vmem:[%s1] sm:$0xf]
  %v23 = vld [vmem:[%s1 + $0x4] sm:$0xf]
  %v24 = vld [vmem:[%s1 + $0x8] sm:$0xf]
  %v25 = vld [vmem:[%s1 + $0xc] sm:$0xf]
  %v26 = vld [vmem:[%s1 + $0x10] sm:$0xf]
  %v27 = vld [vmem:[%s1 + $0x14] sm:$0xf]
  %v28 = vld [vmem:[%s1 + $0x18] sm:$0xf]
  %v29 = vld [vmem:[%s1 + $0x1c] sm:$0xf]
  %v30 = vld [vmem:[%s1 + $0x20] sm:$0xf]
  %v31 = vld [vmem:[%s1 + $0x24] sm:$0xf]
  %v32 = vld [vmem:[%s1 + $0x28] sm:$0xf]
  %v33 = vld [vmem:[%s1 + $0x2c] sm:$0xf]
  %v34 = vld [vmem:[%s1 + $0x30] sm:$0xf]
  %v35 = vld [vmem:[%s1 + $0x34] sm:$0xf]
  %v36 = vld [vmem:[%s1 + $0x38] sm:$0xf]
  %v37 = vld [vmem:[%s1 + $0x3c] sm:$0xf]
  %v54 = vunpack.c.l.b16 %v22
  %v55 = vunpack.c.l.b16 %v23
  %v56 = vunpack.c.l.b16 %v24
  %v57 = vunpack.c.l.b16 %v25
  %v58 = vunpack.c.l.b16 %v26
  %v59 = vunpack.c.l.b16 %v27
  %v60 = vunpack.c.l.b16 %v28
  %v61 = vunpack.c.l.b16 %v29
  %v62 = vunpack.c.l.b16 %v30
  %v63 = vunpack.c.l.b16 %v31
  %v64 = vunpack.c.l.b16 %v32
  %v65 = vunpack.c.l.b16 %v33
  %v66 = vunpack.c.l.b16 %v34
  %v67 = vunpack.c.l.b16 %v35
  %v68 = vunpack.c.l.b16 %v36
  %v69 = vunpack.c.l.b16 %v37
  %v70 = vpack.c.b16 %v55, %v54
  %v71 = vpack.c.b16 %v57, %v56
  %v72 = vpack.c.b16 %v59, %v58
  %v73 = vpack.c.b16 %v61, %v60
  %v74 = vpack.c.b16 %v63, %v62
  %v75 = vpack.c.b16 %v65, %v64
  %v76 = vpack.c.b16 %v67, %v66
  %v77 = vpack.c.b16 %v69, %v68
  %86 = vmatprep.subr.bf16.mxu0 0
  %87 = vmatpush1.bf16.msra.mxu0 %v70
  %88 = vmatprep.subr.bf16.mxu0 0
  %89 = vmatpush1.bf16.msra.mxu0 %v71
  %90 = vmatprep.subr.bf16.mxu0 0
  %91 = vmatpush1.bf16.msra.mxu0 %v72
  %92 = vmatprep.subr.bf16.mxu0 0
  %93 = vmatpush1.bf16.msra.mxu0 %v73
  %94 = vmatprep.subr.bf16.mxu0 0
  %95 = vmatpush1.bf16.msra.mxu0 %v74
  %96 = vmatprep.subr.bf16.mxu0 0
  %97 = vmatpush1.bf16.msra.mxu0 %v75
  %98 = vmatprep.subr.bf16.mxu0 0
  %99 = vmatpush1.bf16.msra.mxu0 %v76
  %100 = vmatprep.subr.bf16.mxu0 0
  %101 = vmatpush1.bf16.msra.mxu0 %v77
  %102 = vmatprep.subr.bf16.mxu0 0
  %103 = vmatpush1.bf16.msra.mxu0 0
  %104 = vmatprep.subr.bf16.mxu0 0
  %105 = vmatpush1.bf16.msra.mxu0 0
  %106 = vmatprep.subr.bf16.mxu0 0
  %107 = vmatpush1.bf16.msra.mxu0 0
  %108 = vmatprep.subr.bf16.mxu0 0
  %109 = vmatpush1.bf16.msra.mxu0 0
  %110 = vmatprep.subr.bf16.mxu0 0
  %111 = vmatpush1.bf16.msra.mxu0 0
  %112 = vmatprep.subr.bf16.mxu0 0
  %113 = vmatpush1.bf16.msra.mxu0 0
  %114 = vmatprep.subr.bf16.mxu0 0
  %115 = vmatpush1.bf16.msra.mxu0 0
  %116 = vmatprep.subr.bf16.mxu0 0
  %117 = vmatpush1.bf16.msra.mxu0 0
  %118 = vmatprep.mubr.bf16.mxu0 0
  %119 = vmatmul.mubr.bf16.gmra.mrb[0].mxu0 %v21
  %v120 = vpop.f32.mrb[0].mxu0
  %v121 = vadd.f32 0.0, %v120
  %v122 = vpop.f32.mrb[0].mxu0
  %v123 = vpop.f32.mrb[0].mxu0
  %v124 = vpop.f32.mrb[0].mxu0
  %125 = vdwg.mxu0
  %v126 = vadd.f32 %v20, %v121
  %127 = vst [vmem:[#allocation2] sm:$0xff] %v126
  // Predicated region
  $region18: #{vector_embedder_forward.3} parent=0 // pred_check
    %p128 = pneg %p15
  $region19: #{vector_embedder_forward.3} parent=0 // pred_check_branch
    %130 = sbr.rel (%p128) target = $region21
  $region20: #{vector_embedder_forward.3} parent=0 // pred_region
    %v131 = vld [vmem:[#allocation2] sm:$0xff]
    %v132 = vld [vmem:[%s2] sm:$0x1]
    %v134 = vlaneseq
    %v135 = vshrl.u32 %v134, 7
    %v136 = vsub.s32 0, %v135
    %v137 = vrot.slane %v132, %v136
    %v139 = vadd.f32 %v131, %v137
    %140 = vst [vmem:[%s3] sm:$0xff] %v139
  $region21: #{vector_embedder_forward.3} parent=0 // pred_fallthru
    _
  // Predicated region
  $region22: #{vector_embedder_forward.3} parent=0 // pred_check
    _
  $region23: #{vector_embedder_forward.3} parent=0 // pred_check_branch
    %142 = sbr.rel (0) target = $region25
  $region24: #{vector_embedder_forward.3} parent=0 // pred_region
    _
  $region25: #{vector_embedder_forward.3} parent=0 // pred_fallthru
    _
  // Predicated region
  $region26: #{vector_embedder_forward.3} parent=0 // pred_check
    _
  $region27: #{vector_embedder_forward.3} parent=0 // pred_check_branch
    %144 = sbr.rel (0) target = $region29
  $region28: #{vector_embedder_forward.3} parent=0 // pred_region
    _
  $region29: #{vector_embedder_forward.3} parent=0 // pred_fallthru
    _

</llo_original>
